<compile_context>
chip_gen: v7x
topology: tpu7x:2x2x1
jax: 0.10.0
libtpu: 0.0.40
codegen_flags: <defaults>
</compile_context>

<pallas_src>
import jax
import jax.numpy as jnp
from jax.experimental import pallas as pl
from jax.experimental.pallas import tpu as pltpu


def _patch_embed_kernel(patches_ref, w_ref, posb_ref, out_ref):
    # patches_ref: (tm, K)   bf16 flattened patches (M tile)
    # w_ref:       (K, tn)   bf16 projection weight tile (grid-invariant in M)
    # posb_ref:    (tm, tn)  f32 position embeddings + conv bias (grid-invariant in M)
    # out_ref:     (tm, tn)  f32 output tile
    acc = jnp.dot(patches_ref[...], w_ref[...],
                  preferred_element_type=jnp.float32)          # MXU, f32 accum
    out_ref[...] = (acc + posb_ref[...]).astype(out_ref.dtype)  # f32 add, f32 store


def _extract_patches(x, patch_size):
    """(B, C, H, W) -> (B, N, C*P*P), row-major patch order (matches
    Conv2d(stride=patch).flatten(2).transpose(1, 2))."""
    B, C, H, W = x.shape
    P = patch_size
    gh, gw = H // P, W // P
    x = x.reshape(B, C, gh, P, gw, P)
    x = jnp.transpose(x, (0, 2, 4, 1, 3, 5))      # (B, gh, gw, C, P, P)
    return x.reshape(B, gh * gw, C * P * P)


def _choose_m_tile(B, N):
    """Largest batch-multiple tile (whole images per tile) that is 8-aligned
    and <= 512 rows; fall back to the full M (always a legal block)."""
    for d in range(B, 0, -1):
        if B % d == 0 and (d * N) % 8 == 0 and d * N <= 512:
            return d, d * N
    return B, B * N


def _choose_hd_tile(Hd):
    """Lane-dense Hd tile: a multiple of 128 dividing Hd (<= 512) when Hd is
    128-aligned, otherwise the full Hd (full-dim block is always legal)."""
    if Hd % 128 == 0:
        tn = min(Hd, 512)
        while Hd % tn != 0:
            tn -= 128
        return tn
    return Hd


def patch_embed(patches, w_mat, posb):
    """patches: (B, N, K) bf16, w_mat: (K, Hd) f32/bf16, posb: (N, Hd) f32
    (position embeddings with the conv bias already folded in).
    Returns (B, N, Hd) f32."""
    B, N, K = patches.shape
    Hd = w_mat.shape[1]
    M = B * N

    b_per_tile, tm = _choose_m_tile(B, N)
    tn = _choose_hd_tile(Hd)
    num_m_tiles = M // tm
    num_hd_tiles = Hd // tn

    patches_2d = patches.reshape(M, K).astype(jnp.bfloat16)
    w_bf16 = w_mat.astype(jnp.bfloat16)
    # pos+bias repeats every N rows -> one (tm, Hd) slab covers any M tile.
    posb_tile = jnp.tile(posb.astype(jnp.float32), (b_per_tile, 1))  # (tm, Hd)

    out2d = pl.pallas_call(
        _patch_embed_kernel,
        out_shape=jax.ShapeDtypeStruct((M, Hd), jnp.float32),
        grid_spec=pltpu.PrefetchScalarGridSpec(
            num_scalar_prefetch=0,
            # Hd-tile axis outer, M-tile axis inner: weight / pos+bias blocks
            # (which only depend on j) stay resident across the inner M loop.
            grid=(num_hd_tiles, num_m_tiles),
            in_specs=[
                pl.BlockSpec((tm, K), lambda j, m: (m, 0)),   # patches
                pl.BlockSpec((K, tn), lambda j, m: (0, j)),   # weight (resident in M)
                pl.BlockSpec((tm, tn), lambda j, m: (0, j)),  # pos+bias (resident in M)
            ],
            out_specs=pl.BlockSpec((tm, tn), lambda j, m: (m, j)),
        ),
        compiler_params=pltpu.CompilerParams(
            dimension_semantics=("parallel", "parallel"),
            vmem_limit_bytes=48 * 1024 * 1024,
        ),
    )(patches_2d, w_bf16, posb_tile)

    return out2d.reshape(B, N, Hd)


def embeddings_forward(x_rgb, x_hsi, params, patch_size):
    """Non-hybrid Embeddings.forward. Returns (x_rgb, x_hsi, features, reg_loss)."""
    # bf16 patches: halves the materialized HBM traffic and feeds the MXU directly.
    p_rgb = _extract_patches(x_rgb.astype(jnp.bfloat16), patch_size)
    p_hsi = _extract_patches(x_hsi.astype(jnp.bfloat16), patch_size)

    # Fold the conv bias into the position embeddings once (one less DMA stream).
    posb_rgb = params["pos"][0] + params["b_rgb"]   # (N, Hd)
    posb_hsi = params["pos"][0] + params["b_hsi"]   # (N, Hd)

    out_rgb = patch_embed(p_rgb, params["w_rgb"], posb_rgb)
    out_hsi = patch_embed(p_hsi, params["w_hsi"], posb_hsi)
    # dropout (eval) == identity
    return out_rgb, out_hsi, None, None


def init_params(key, in_channels, hidden_size, patch_size, num_patches):
    k1, k2, k3, k4, k5 = jax.random.split(key, 5)
    K = in_channels * patch_size * patch_size
    # Conv2d weight shape: (hidden, C, P, P) -> matmul form (K, hidden)
    w_rgb = jax.random.normal(k1, (hidden_size, in_channels, patch_size, patch_size),
                              jnp.float32) * 0.02
    w_hsi = jax.random.normal(k2, (hidden_size, in_channels, patch_size, patch_size),
                              jnp.float32) * 0.02
    return {
        "w_rgb": w_rgb.reshape(hidden_size, K).T,
        "w_hsi": w_hsi.reshape(hidden_size, K).T,
        "b_rgb": jax.random.normal(k3, (1, hidden_size), jnp.float32) * 0.02,
        "b_hsi": jax.random.normal(k4, (1, hidden_size), jnp.float32) * 0.02,
        # nn.Parameter(torch.zeros(1, N, hidden)) — small random here so the
        # positional add is observable; deterministic from the key.
        "pos": jax.random.normal(k5, (1, num_patches, hidden_size), jnp.float32) * 0.02,
    }


if __name__ == "__main__":
    # Small, forward-consistent shapes: batch=2, channels=4, img=16x16, patch=4
    B, C, H, W = 2, 4, 16, 16
    PATCH = 4
    HIDDEN = 32
    N = (H // PATCH) * (W // PATCH)   # num_patches = 16

    key = jax.random.PRNGKey(0)
    kx, kh, kp = jax.random.split(key, 3)
    x_rgb = jax.random.normal(kx, (B, C, H, W), jnp.float32)
    x_hsi = jax.random.normal(kh, (B, C, H, W), jnp.float32)

    params = init_params(kp, C, HIDDEN, PATCH, N)

    out_rgb, out_hsi, features, reg_loss = embeddings_forward(
        x_rgb, x_hsi, params, PATCH)
    jax.block_until_ready((out_rgb, out_hsi))

    # Pure-JAX reference (same bf16 cast of patches/weight, f32 accumulation).
    def ref(x, w, b, pos):
        p = _extract_patches(x.astype(jnp.bfloat16), PATCH).astype(jnp.float32)
        w32 = w.astype(jnp.bfloat16).astype(jnp.float32)
        return jnp.einsum("bnk,kh->bnh", p, w32) + b[None] + pos

    ref_rgb = ref(x_rgb, params["w_rgb"], params["b_rgb"], params["pos"])
    ref_hsi = ref(x_hsi, params["w_hsi"], params["b_hsi"], params["pos"])

    assert out_rgb.shape == (B, N, HIDDEN) and out_hsi.shape == (B, N, HIDDEN)
    assert jnp.allclose(out_rgb, ref_rgb, atol=5e-3, rtol=5e-3)
    assert jnp.allclose(out_hsi, ref_hsi, atol=5e-3, rtol=5e-3)

    print("KERNEL_OK")
</pallas_src>

<mosaic_0001>
module attributes {stable_mosaic.version = 11 : i64} {
  func.func @_patch_embed_kernel(%arg0: i32, %arg1: i32, %arg2: memref<32x64xbf16, #tpu.memory_space<vmem>>, %arg3: memref<64x32xbf16, #tpu.memory_space<vmem>>, %arg4: memref<32x32xf32, #tpu.memory_space<vmem>>, %arg5: memref<32x32xf32, #tpu.memory_space<vmem>>) attributes {dimension_semantics = [#tpu.dimension_semantics<parallel>, #tpu.dimension_semantics<parallel>], iteration_bounds = array<i64: 1, 1>, scalar_prefetch = 0 : i64, scratch_operands = 0 : i64, tpu.core_type = #tpu.core_type<tc>, window_params = [{transform_indices = @transform_0, window_bounds = array<i64: 32, 64>}, {transform_indices = @transform_1, window_bounds = array<i64: 64, 32>}, {transform_indices = @transform_2, window_bounds = array<i64: 32, 32>}, {transform_indices = @transform_3, window_bounds = array<i64: 32, 32>}]} {
    %c0 = arith.constant 0 : index
    %c0_0 = arith.constant 0 : index
    %0 = vector.load %arg2[%c0, %c0_0] : memref<32x64xbf16, #tpu.memory_space<vmem>>, vector<32x64xbf16>
    %c0_1 = arith.constant 0 : index
    %c0_2 = arith.constant 0 : index
    %1 = vector.load %arg3[%c0_1, %c0_2] : memref<64x32xbf16, #tpu.memory_space<vmem>>, vector<64x32xbf16>
    %cst = arith.constant dense<0.000000e+00> : vector<32x32xf32>
    %2 = tpu.matmul %0, %1, %cst {dimension_numbers = #tpu.dot_dimension_numbers<[1], [0], [0], [1], [0, 0, 1, 1], [], []>} : vector<32x64xbf16>, vector<64x32xbf16>, vector<32x32xf32> -> vector<32x32xf32>
    %c0_3 = arith.constant 0 : index
    %c0_4 = arith.constant 0 : index
    %3 = vector.load %arg4[%c0_3, %c0_4] : memref<32x32xf32, #tpu.memory_space<vmem>>, vector<32x32xf32>
    %4 = arith.addf %2, %3 : vector<32x32xf32>
    %c0_5 = arith.constant 0 : index
    %c0_6 = arith.constant 0 : index
    %5 = vector.load %arg5[%c0_5, %c0_6] : memref<32x32xf32, #tpu.memory_space<vmem>>, vector<32x32xf32>
    tpu.vector_store %arg5[%c0_5, %c0_6], %4 {strides = array<i32>} : memref<32x32xf32, #tpu.memory_space<vmem>>, vector<32x32xf32>,
    return
  }
  func.func @transform_0(%arg0: i32, %arg1: i32) -> (i32, i32) {
    %c0_i32 = arith.constant 0 : i32
    %c0_i32_0 = arith.constant 0 : i32
    return %arg1, %c0_i32 : i32, i32
  }
  func.func @transform_1(%arg0: i32, %arg1: i32) -> (i32, i32) {
    %c0_i32 = arith.constant 0 : i32
    %c0_i32_0 = arith.constant 0 : i32
    return %c0_i32, %arg0 : i32, i32
  }
  func.func @transform_2(%arg0: i32, %arg1: i32) -> (i32, i32) {
    %c0_i32 = arith.constant 0 : i32
    %c0_i32_0 = arith.constant 0 : i32
    return %c0_i32, %arg0 : i32, i32
  }
  func.func @transform_3(%arg0: i32, %arg1: i32) -> (i32, i32) {
    %c0_i32 = arith.constant 0 : i32
    return %arg1, %arg0 : i32, i32
  }
}

</mosaic_0001>

<llo_original>
// kernel: tpu_custom_call.1
$region0: #{tpu_custom_call.1}
  #allocation0 [shape = 'u32[]', space=smem, size = 0x4, offset = 0x4, fixed_abs, tag = 'smem constant byte address 0x4 - core index']
  #allocation1 [shape = 'u32[144,128]{1,0:T(1,128)}', space=vmem, size = 0x12000, scoped, tag = 'internal scratch']
  %s0 = inlined_call_operand.vmem [shape: bf16[32,64], index: 0, kind: input, shape index: {}]
  %s1 = inlined_call_operand.vmem [shape: bf16[64,32], index: 1, kind: input, shape index: {}]
  %s2 = inlined_call_operand.vmem [shape: f32[32,32], index: 2, kind: input, shape index: {}]
  %s3 = inlined_call_operand.hbm [shape: f32[32,32], index: 3, kind: output, shape index: {}]
  %s4 = sld [smem:[#allocation0]]
  $region22: #{tpu_custom_call.1} parent=0
    _
  %s6 = ssub.s32 1, %s4
  %s7 = scalar_select 0, %s6, %s4
  $region1: #{tpu_custom_call.1} parent=0
    #allocation2 [shape = 'u8[16384]{0}', space=vmem, size = 0x4000, scoped, tag = 'output window, operand 0, single buffered']
    #allocation3 [shape = 's32[1]{0}', space=sflag, size = 0x4, scoped, tag = 'scoped memory for tpu_custom_call.1']
    %8 = vsyncpa [#allocation3], 0
    // Predicated region
    $region2: #{tpu_custom_call.1} parent=1 // pred_check
      _
    $region3: #{tpu_custom_call.1} parent=1 // pred_check_branch
      %10 = sbr.rel (0) target = $region5
    $region4: #{tpu_custom_call.1} parent=1 // pred_region
      _
    $region5: #{tpu_custom_call.1} parent=1 // pred_fallthru
      _
    // Predicated region
    $region6: #{tpu_custom_call.1} parent=1 // pred_check
      _
    $region7: #{tpu_custom_call.1} parent=1 // pred_check_branch
      %12 = sbr.rel (0) target = $region9
    $region8: #{tpu_custom_call.1} parent=1 // pred_region
      _
    $region9: #{tpu_custom_call.1} parent=1 // pred_fallthru
      _
    // Predicated region
    $region10: #{tpu_custom_call.1} parent=1 // pred_check
      _
    $region11: #{tpu_custom_call.1} parent=1 // pred_check_branch
      %14 = sbr.rel (0) target = $region13
    $region12: #{tpu_custom_call.1} parent=1 // pred_region
      _
    $region13: #{tpu_custom_call.1} parent=1 // pred_fallthru
      _
    %v16 = vld [vmem:[%s0] sm:$0xf]
    %v17 = vld [vmem:[%s0 + $0x4] sm:$0xf]
    %v18 = vld [vmem:[%s0 + $0x8] sm:$0xf]
    %v19 = vld [vmem:[%s0 + $0xc] sm:$0xf]
    %v20 = vld [vmem:[%s1] sm:$0xf]
    %v21 = vld [vmem:[%s1 + $0x4] sm:$0xf]
    %v22 = vld [vmem:[%s1 + $0x8] sm:$0xf]
    %v23 = vld [vmem:[%s1 + $0xc] sm:$0xf]
    %v24 = vld [vmem:[%s1 + $0x10] sm:$0xf]
    %v25 = vld [vmem:[%s1 + $0x14] sm:$0xf]
    %v26 = vld [vmem:[%s1 + $0x18] sm:$0xf]
    %v27 = vld [vmem:[%s1 + $0x1c] sm:$0xf]
    %v28 = vld [vmem:[%s2] sm:$0xff]
    %v29 = vld [vmem:[%s2 + $0x8] sm:$0xff]
    %v30 = vld [vmem:[%s2 + $0x10] sm:$0xff]
    %v31 = vld [vmem:[%s2 + $0x18] sm:$0xff]
    %v36 = vunpack.c.l.b16 %v16
    %v37 = vunpack.c.l.b16 %v17
    %v38 = vunpack.c.l.b16 %v18
    %v39 = vunpack.c.l.b16 %v19
    %v40 = vpack.c.b16 %v37, %v36
    %v41 = vpack.c.b16 %v39, %v38
    %v50 = vunpack.c.l.b16 %v20
    %v51 = vunpack.c.l.b16 %v21
    %v52 = vunpack.c.l.b16 %v22
    %v53 = vunpack.c.l.b16 %v23
    %v54 = vunpack.c.l.b16 %v24
    %v55 = vunpack.c.l.b16 %v25
    %v56 = vunpack.c.l.b16 %v26
    %v57 = vunpack.c.l.b16 %v27
    %v58 = vpack.c.b16 %v51, %v50
    %v59 = vpack.c.b16 %v53, %v52
    %v60 = vpack.c.b16 %v55, %v54
    %v61 = vpack.c.b16 %v57, %v56
    %vm66 = vcmask 523264
    %v68 = vsel %vm66, %v40, 0
    %v71 = vsel %vm66, %v41, 0
    %73 = vmatprep.subr.bf16.mxu0 0
    %74 = vmatpush1.bf16.msra.mxu0 %v58
    %75 = vmatprep.subr.bf16.mxu0 0
    %76 = vmatpush1.bf16.msra.mxu0 %v59
    %77 = vmatprep.subr.bf16.mxu0 0
    %78 = vmatpush1.bf16.msra.mxu0 %v60
    %79 = vmatprep.subr.bf16.mxu0 0
    %80 = vmatpush1.bf16.msra.mxu0 %v61
    %81 = vmatprep.subr.bf16.mxu0 0
    %82 = vmatpush1.bf16.msra.mxu0 0
    %83 = vmatprep.subr.bf16.mxu0 0
    %84 = vmatpush1.bf16.msra.mxu0 0
    %85 = vmatprep.subr.bf16.mxu0 0
    %86 = vmatpush1.bf16.msra.mxu0 0
    %87 = vmatprep.subr.bf16.mxu0 0
    %88 = vmatpush1.bf16.msra.mxu0 0
    %89 = vmatprep.subr.bf16.mxu0 0
    %90 = vmatpush1.bf16.msra.mxu0 0
    %91 = vmatprep.subr.bf16.mxu0 0
    %92 = vmatpush1.bf16.msra.mxu0 0
    %93 = vmatprep.subr.bf16.mxu0 0
    %94 = vmatpush1.bf16.msra.mxu0 0
    %95 = vmatprep.subr.bf16.mxu0 0
    %96 = vmatpush1.bf16.msra.mxu0 0
    %97 = vmatprep.subr.bf16.mxu0 0
    %98 = vmatpush1.bf16.msra.mxu0 0
    %99 = vmatprep.subr.bf16.mxu0 0
    %100 = vmatpush1.bf16.msra.mxu0 0
    %101 = vmatprep.subr.bf16.mxu0 0
    %102 = vmatpush1.bf16.msra.mxu0 0
    %103 = vmatprep.subr.bf16.mxu0 0
    %104 = vmatpush1.bf16.msra.mxu0 0
    %105 = vmatprep.mubr.bf16.mxu0 0
    %106 = vmatmul.mubr.bf16.gmra.mrb[0].mxu0 %v68
    %v107 = vpop.f32.mrb[0].mxu0
    %v108 = vadd.f32 %v28, %v107
    %v109 = vpop.f32.mrb[0].mxu0
    %v110 = vpop.f32.mrb[0].mxu0
    %v111 = vadd.f32 %v29, %v110
    %v112 = vpop.f32.mrb[0].mxu0
    %113 = vmatprep.mubr.bf16.mxu0 0
    %114 = vmatmul.mubr.bf16.gmra.mrb[0].mxu0 %v71
    %v115 = vpop.f32.mrb[0].mxu0
    %v116 = vadd.f32 %v30, %v115
    %v117 = vpop.f32.mrb[0].mxu0
    %v118 = vpop.f32.mrb[0].mxu0
    %v119 = vadd.f32 %v31, %v118
    %v120 = vpop.f32.mrb[0].mxu0
    %121 = vdwg.mxu0
    %vm122 = vcmask 261120
    %123 = vst.msk [vmem:[#allocation2] sm:$0xff] %vm122, %v108
    %124 = vst.msk [vmem:[#allocation2 + $0x8] sm:$0xff] %vm122, %v111
    %125 = vst.msk [vmem:[#allocation2 + $0x10] sm:$0xff] %vm122, %v116
    %126 = vst.msk [vmem:[#allocation2 + $0x18] sm:$0xff] %vm122, %v119
    // Predicated region
    $region14: #{tpu_custom_call.1} parent=1 // pred_check
      _
    $region15: #{tpu_custom_call.1} parent=1 // pred_check_branch
      %128 = sbr.rel (0) target = $region17
    $region16: #{tpu_custom_call.1} parent=1 // pred_region
      %s130 = ssub.s32 512, 512
      %131 = vsyncadd [#allocation3], %s130
      %s132 = sshll.u32 [#allocation2], 4
      %s133 = int_to_ptr.vmem [resolvable:$true] %s132
      %138 = dma.vmem_to_hbm [thread:$0]  %s133, 512, %s3, [#allocation3], 128, 128, 8
    $region17: #{tpu_custom_call.1} parent=1 // pred_fallthru
      _
    // Predicated region
    $region18: #{tpu_custom_call.1} parent=1 // pred_check
      _
    $region19: #{tpu_custom_call.1} parent=1 // pred_check_branch
      %140 = sbr.rel (0) target = $region21
    $region20: #{tpu_custom_call.1} parent=1 // pred_region
      %141 = dma.done [#allocation3], 512
    $region21: #{tpu_custom_call.1} parent=1 // pred_fallthru
      _
    %142 = vsyncpa [#allocation3], 1

</llo_original>
